<compile_context>
chip_gen: v5e
topology: v5e:2x2
jax: 0.10.0
libtpu: 0.0.40
codegen_flags: <defaults>
</compile_context>

<pallas_src>
import functools

import jax
import jax.numpy as jnp
from jax.experimental import pallas as pl
from jax.experimental.pallas import tpu as pltpu

_NEG_BIG = jnp.float32(-1e30)  # padded-lane logit sentinel (exp -> 0); keep f32!


def _round_up(x, m):
    return ((x + m - 1) // m) * m


def _choose_batch_tile(B):
    """Pick (TB, B_pad).

    * bf16 x-tile -> pad batch to whole packed sublanes (multiple of 16).
    * Large batches: TB up to 512 (multiple of 256 fills the 2x256 MXU on
      v6e/v7x) to amortize the ~0.35us/grid-step pipeline overhead.
    * Guarantee >= 2 grid steps once B_pad >= 256 so the 'parallel' grid axis
      can actually shard across the two v7x TensorCores.
    """
    b16 = _round_up(B, 16)
    if b16 < 256:
        return b16, b16
    tb = min(512, _round_up(b16 // 2, 128))
    return tb, _round_up(b16, tb)


def _softmax_lastdim(logits):
    """Stable softmax over last axis (EUP approx reciprocal + 1 Newton step)."""
    m = jnp.max(logits, axis=-1, keepdims=True)
    p = jnp.exp(logits - m)
    s = jnp.sum(p, axis=-1, keepdims=True)
    r = pl.reciprocal(s, approx=True)
    r = r * (jnp.float32(2.0) - s * r)  # Newton iteration -> ~f32 accuracy
    return p * r


def _fused_head_kernel(x_ref, w_ref, b_ref, o1_ref, o2_ref, *, n1_pad):
    """Fused two-head prediction.

    x_ref:  (TB, emb_dim)              bf16 input-feature tile
    w_ref:  (emb_dim, n1_pad + n2_pad) bf16 [W_pri_x | W_sec_x], zero-padded
    b_ref:  (1, n1_pad + n2_pad)       f32 effective biases (e-term folded),
                                       padded lanes = -1e30
    o1_ref: (TB, n1_pad)               f32 softmax over primary head (padded)
    o2_ref: (TB, n2_pad)               f32 softmax over secondary head (padded)
    """
    x = x_ref[...]
    x = jnp.maximum(x, x * 0.01)  # leaky_relu on in_feat only (bf16)

    # Head 1, then head 2: only one (TB, head_pad) f32 logits block live at a
    # time.  Slices of w_ref/b_ref are static & lane-aligned (n1_pad % 128 == 0).
    l1 = jnp.dot(x, w_ref[:, :n1_pad],
                 preferred_element_type=jnp.float32) + b_ref[:, :n1_pad]
    o1_ref[...] = _softmax_lastdim(l1).astype(o1_ref.dtype)

    l2 = jnp.dot(x, w_ref[:, n1_pad:],
                 preferred_element_type=jnp.float32) + b_ref[:, n1_pad:]
    o2_ref[...] = _softmax_lastdim(l2).astype(o2_ref.dtype)


def lblpred_init(S, Phi, w_pri, b_pri, w_sec, b_sec, emb_dim, N_1, N_2):
    """One-time batch-independent precompute (do this at parameter-load time).

    Returns (w_x_bf16, b_fused_f32, n1_pad, n2_pad).  This is the step that
    streams the large (N_out, emb_dim*(N+1)) weights from HBM; it must NOT be
    re-run per forward call.
    """
    lrelu = lambda v: jnp.where(v >= 0, v, 0.01 * v)

    S_scaled = S.astype(jnp.float32) / 1000.0            # (N_2, emb_dim)
    P = jnp.matmul(Phi.astype(jnp.float32), S_scaled)    # (N_1, emb_dim)
    p_flat = lrelu(P.reshape(-1))                        # (emb_dim*N_1,)
    s_flat = lrelu(S_scaled.reshape(-1))                 # (emb_dim*N_2,)

    # Fold the constant e-term into the bias: contract the weight's 'in' axis
    # directly (matvec) — no transpose of the big weight is ever materialized.
    b_eff_p = jnp.dot(w_pri[:, emb_dim:].astype(jnp.float32), p_flat) + b_pri
    b_eff_s = jnp.dot(w_sec[:, emb_dim:].astype(jnp.float32), s_flat) + b_sec

    n1_pad = _round_up(N_1, 128)
    n2_pad = _round_up(N_2, 128)
    n_tot = n1_pad + n2_pad

    w_x = jnp.zeros((emb_dim, n_tot), jnp.float32)
    w_x = w_x.at[:, :N_1].set(w_pri[:, :emb_dim].astype(jnp.float32).T)
    w_x = w_x.at[:, n1_pad:n1_pad + N_2].set(w_sec[:, :emb_dim].astype(jnp.float32).T)
    w_x = w_x.astype(jnp.bfloat16)  # bf16 MXU operand (halves per-call HBM read)

    b_fused = jnp.full((1, n_tot), _NEG_BIG, jnp.float32)  # MUST stay f32
    b_fused = b_fused.at[0, :N_1].set(b_eff_p)
    b_fused = b_fused.at[0, n1_pad:n1_pad + N_2].set(b_eff_s)

    return w_x, b_fused, n1_pad, n2_pad


@functools.partial(jax.jit, static_argnums=(3, 4, 5, 6))
def lblpred_apply(in_feat, w_x, b_fused, n1_pad, n2_pad, N_1, N_2):
    """Per-batch hot path: leaky_relu + fused matmul + bias + two softmaxes."""
    B, emb_dim = in_feat.shape
    n_tot = n1_pad + n2_pad

    x = in_feat.astype(jnp.bfloat16)
    TB, B_pad = _choose_batch_tile(B)
    if B_pad != B:
        x = jnp.pad(x, ((0, B_pad - B), (0, 0)))

    kernel = functools.partial(_fused_head_kernel, n1_pad=n1_pad)
    out_p_pad, out_s_pad = pl.pallas_call(
        kernel,
        out_shape=(
            jax.ShapeDtypeStruct((B_pad, n1_pad), jnp.float32),
            jax.ShapeDtypeStruct((B_pad, n2_pad), jnp.float32),
        ),
        grid=(B_pad // TB,),
        in_specs=[
            pl.BlockSpec((TB, emb_dim), lambda i: (i, 0)),
            pl.BlockSpec((emb_dim, n_tot), lambda i: (0, 0)),  # resident weight
            pl.BlockSpec((1, n_tot), lambda i: (0, 0)),        # resident bias
        ],
        out_specs=(
            pl.BlockSpec((TB, n1_pad), lambda i: (i, 0)),
            pl.BlockSpec((TB, n2_pad), lambda i: (i, 0)),
        ),
        compiler_params=pltpu.CompilerParams(
            dimension_semantics=("parallel",),
            vmem_limit_bytes=32 * 1024 * 1024,  # covers v5e's 16 MiB default
        ),
    )(x, w_x, b_fused)

    return out_p_pad[:B, :N_1], out_s_pad[:B, :N_2]


def lblpred_forward(in_feat, S, Phi, w_pri, b_pri, w_sec, b_sec,
                    emb_dim, N_1, N_2):
    """Convenience one-shot path.  For repeated inference, call lblpred_init
    once and reuse its outputs with lblpred_apply (that is the fast path)."""
    w_x, b_fused, n1_pad, n2_pad = lblpred_init(
        S, Phi, w_pri, b_pri, w_sec, b_sec, emb_dim, N_1, N_2)
    return lblpred_apply(in_feat, w_x, b_fused, n1_pad, n2_pad, N_1, N_2)


def _reference_forward(in_feat, S, Phi, w_pri, b_pri, w_sec, b_sec):
    """Plain-JAX f32 reference mirroring the PyTorch code, for verification."""
    B = in_feat.shape[0]
    S_scaled = S / 1000.0
    P = jnp.matmul(Phi, S_scaled)
    S_flat = jnp.tile(S_scaled.reshape(1, -1), (B, 1))
    P_flat = jnp.tile(P.reshape(1, -1), (B, 1))
    xp = jnp.concatenate([in_feat, P_flat], axis=1)
    xs = jnp.concatenate([in_feat, S_flat], axis=1)
    lrelu = lambda v: jnp.where(v >= 0, v, 0.01 * v)
    logits_p = lrelu(xp) @ w_pri.T + b_pri
    logits_s = lrelu(xs) @ w_sec.T + b_sec
    return jax.nn.softmax(logits_p, axis=1), jax.nn.softmax(logits_s, axis=1)


if __name__ == "__main__":
    # Small, forward-consistent shapes (real module: emb_dim=768, N_1=29, N_2=159).
    B = 4          # batch
    emb_dim = 32   # embedding dim
    N_1 = 8        # primary classes
    N_2 = 16       # secondary classes

    key = jax.random.PRNGKey(0)
    k_in, k_S, k_Phi, k_wp, k_bp, k_ws, k_bs = jax.random.split(key, 7)

    in_feat = jax.random.normal(k_in, (B, emb_dim), dtype=jnp.float32)
    S = jax.random.normal(k_S, (N_2, emb_dim), dtype=jnp.float32)
    Phi = jax.random.normal(k_Phi, (N_1, N_2), dtype=jnp.float32)

    # nn.Linear parameters (weight stored (out, in), like PyTorch).
    w_pri = 0.05 * jax.random.normal(k_wp, (N_1, emb_dim * (N_1 + 1)), dtype=jnp.float32)
    b_pri = 0.05 * jax.random.normal(k_bp, (N_1,), dtype=jnp.float32)
    w_sec = 0.05 * jax.random.normal(k_ws, (N_2, emb_dim * (N_2 + 1)), dtype=jnp.float32)
    b_sec = 0.05 * jax.random.normal(k_bs, (N_2,), dtype=jnp.float32)

    # One-time precompute (parameter-load time) — NOT on the per-call path.
    w_x, b_fused, n1_pad, n2_pad = lblpred_init(
        S, Phi, w_pri, b_pri, w_sec, b_sec, emb_dim, N_1, N_2)
    w_x, b_fused = jax.block_until_ready((w_x, b_fused))

    # Per-batch hot path (jitted; only the fused Pallas kernel runs here).
    out_p, out_s = lblpred_apply(in_feat, w_x, b_fused, n1_pad, n2_pad, N_1, N_2)
    jax.block_until_ready((out_p, out_s))

    ref_p, ref_s = _reference_forward(in_feat, S, Phi, w_pri, b_pri, w_sec, b_sec)

    assert out_p.shape == (B, N_1) and out_s.shape == (B, N_2)
    # bf16 x/weight operands -> compare against the f32 reference at bf16-level tol.
    assert jnp.allclose(out_p, ref_p, atol=1e-2, rtol=1e-2)
    assert jnp.allclose(out_s, ref_s, atol=1e-2, rtol=1e-2)
    assert jnp.allclose(jnp.sum(out_p, axis=1), 1.0, atol=1e-4)
    assert jnp.allclose(jnp.sum(out_s, axis=1), 1.0, atol=1e-4)

    print("KERNEL_OK")
</pallas_src>

<mosaic_0001>
module attributes {stable_mosaic.version = 11 : i64} {
  func.func @_fused_head_kernel(%arg0: i32, %arg1: memref<16x32xbf16, #tpu.memory_space<vmem>>, %arg2: memref<32x256xbf16, #tpu.memory_space<vmem>>, %arg3: memref<1x256xf32, #tpu.memory_space<vmem>>, %arg4: memref<16x128xf32, #tpu.memory_space<vmem>>, %arg5: memref<16x128xf32, #tpu.memory_space<vmem>>) attributes {dimension_semantics = [#tpu.dimension_semantics<parallel>], iteration_bounds = array<i64: 1>, scalar_prefetch = 0 : i64, scratch_operands = 0 : i64, tpu.core_type = #tpu.core_type<tc>, window_params = [{transform_indices = @transform_0, window_bounds = array<i64: 16, 32>}, {pipeline_mode = #tpu.pipeline_mode<synchronous>, transform_indices = @transform_1, window_bounds = array<i64: 32, 256>}, {pipeline_mode = #tpu.pipeline_mode<synchronous>, transform_indices = @transform_2, window_bounds = array<i64: 1, 256>}, {transform_indices = @transform_3, window_bounds = array<i64: 16, 128>}, {transform_indices = @transform_4, window_bounds = array<i64: 16, 128>}]} {
    %c0 = arith.constant 0 : index
    %c0_0 = arith.constant 0 : index
    %0 = vector.load %arg1[%c0, %c0_0] : memref<16x32xbf16, #tpu.memory_space<vmem>>, vector<16x32xbf16>
    %cst = arith.constant 1.000980e-02 : bf16
    %1 = vector.broadcast %cst : bf16 to vector<16x32xbf16>
    %2 = arith.mulf %0, %1 : vector<16x32xbf16>
    %3 = arith.maximumf %0, %2 : vector<16x32xbf16>
    %c0_1 = arith.constant 0 : index
    %c0_2 = arith.constant 0 : index
    %4 = vector.load %arg2[%c0_1, %c0_2] : memref<32x256xbf16, #tpu.memory_space<vmem>>, vector<32x128xbf16>
    %cst_3 = arith.constant dense<0.000000e+00> : vector<16x128xf32>
    %5 = tpu.matmul %3, %4, %cst_3 {dimension_numbers = #tpu.dot_dimension_numbers<[1], [0], [0], [1], [0, 0, 1, 1], [], []>} : vector<16x32xbf16>, vector<32x128xbf16>, vector<16x128xf32> -> vector<16x128xf32>
    %c0_4 = arith.constant 0 : index
    %c0_5 = arith.constant 0 : index
    %6 = vector.load %arg3[%c0_4, %c0_5] : memref<1x256xf32, #tpu.memory_space<vmem>>, vector<1x128xf32>
    %7 = vector.broadcast %6 : vector<1x128xf32> to vector<16x128xf32>
    %8 = arith.addf %5, %7 : vector<16x128xf32>
    %cst_6 = arith.constant dense<0xFF800000> : vector<16xf32>
    %9 = vector.multi_reduction <maximumf>, %8, %cst_6 [1] : vector<16x128xf32> to vector<16xf32>
    %10 = vector.shape_cast %9 : vector<16xf32> to vector<16x1xf32>
    %11 = vector.broadcast %10 : vector<16x1xf32> to vector<16x128xf32>
    %12 = arith.subf %8, %11 : vector<16x128xf32>
    %13 = math.exp %12 : vector<16x128xf32>
    %cst_7 = arith.constant dense<0.000000e+00> : vector<16xf32>
    %14 = vector.multi_reduction <add>, %13, %cst_7 [1] : vector<16x128xf32> to vector<16xf32>
    %15 = vector.shape_cast %14 : vector<16xf32> to vector<16x1xf32>
    %16 = tpu.reciprocal %15 {approx = true} : vector<16x1xf32> -> vector<16x1xf32>
    %17 = arith.mulf %15, %16 : vector<16x1xf32>
    %cst_8 = arith.constant 2.000000e+00 : f32
    %18 = vector.broadcast %cst_8 : f32 to vector<16x1xf32>
    %19 = arith.subf %18, %17 : vector<16x1xf32>
    %20 = arith.mulf %16, %19 : vector<16x1xf32>
    %21 = vector.broadcast %20 : vector<16x1xf32> to vector<16x128xf32>
    %22 = arith.mulf %13, %21 : vector<16x128xf32>
    %c0_9 = arith.constant 0 : index
    %c0_10 = arith.constant 0 : index
    %23 = vector.load %arg4[%c0_9, %c0_10] : memref<16x128xf32, #tpu.memory_space<vmem>>, vector<16x128xf32>
    tpu.vector_store %arg4[%c0_9, %c0_10], %22 {strides = array<i32>} : memref<16x128xf32, #tpu.memory_space<vmem>>, vector<16x128xf32>,
    %c0_11 = arith.constant 0 : index
    %c128 = arith.constant 128 : index
    %24 = vector.load %arg2[%c0_11, %c128] : memref<32x256xbf16, #tpu.memory_space<vmem>>, vector<32x128xbf16>
    %cst_12 = arith.constant dense<0.000000e+00> : vector<16x128xf32>
    %25 = tpu.matmul %3, %24, %cst_12 {dimension_numbers = #tpu.dot_dimension_numbers<[1], [0], [0], [1], [0, 0, 1, 1], [], []>} : vector<16x32xbf16>, vector<32x128xbf16>, vector<16x128xf32> -> vector<16x128xf32>
    %c0_13 = arith.constant 0 : index
    %c128_14 = arith.constant 128 : index
    %26 = vector.load %arg3[%c0_13, %c128_14] : memref<1x256xf32, #tpu.memory_space<vmem>>, vector<1x128xf32>
    %27 = vector.broadcast %26 : vector<1x128xf32> to vector<16x128xf32>
    %28 = arith.addf %25, %27 : vector<16x128xf32>
    %cst_15 = arith.constant dense<0xFF800000> : vector<16xf32>
    %29 = vector.multi_reduction <maximumf>, %28, %cst_15 [1] : vector<16x128xf32> to vector<16xf32>
    %30 = vector.shape_cast %29 : vector<16xf32> to vector<16x1xf32>
    %31 = vector.broadcast %30 : vector<16x1xf32> to vector<16x128xf32>
    %32 = arith.subf %28, %31 : vector<16x128xf32>
    %33 = math.exp %32 : vector<16x128xf32>
    %cst_16 = arith.constant dense<0.000000e+00> : vector<16xf32>
    %34 = vector.multi_reduction <add>, %33, %cst_16 [1] : vector<16x128xf32> to vector<16xf32>
    %35 = vector.shape_cast %34 : vector<16xf32> to vector<16x1xf32>
    %36 = tpu.reciprocal %35 {approx = true} : vector<16x1xf32> -> vector<16x1xf32>
    %37 = arith.mulf %35, %36 : vector<16x1xf32>
    %cst_17 = arith.constant 2.000000e+00 : f32
    %38 = vector.broadcast %cst_17 : f32 to vector<16x1xf32>
    %39 = arith.subf %38, %37 : vector<16x1xf32>
    %40 = arith.mulf %36, %39 : vector<16x1xf32>
    %41 = vector.broadcast %40 : vector<16x1xf32> to vector<16x128xf32>
    %42 = arith.mulf %33, %41 : vector<16x128xf32>
    %c0_18 = arith.constant 0 : index
    %c0_19 = arith.constant 0 : index
    %43 = vector.load %arg5[%c0_18, %c0_19] : memref<16x128xf32, #tpu.memory_space<vmem>>, vector<16x128xf32>
    tpu.vector_store %arg5[%c0_18, %c0_19], %42 {strides = array<i32>} : memref<16x128xf32, #tpu.memory_space<vmem>>, vector<16x128xf32>,
    return
  }
  func.func @transform_0(%arg0: i32) -> (i32, i32) {
    %c0_i32 = arith.constant 0 : i32
    %c0_i32_0 = arith.constant 0 : i32
    return %arg0, %c0_i32 : i32, i32
  }
  func.func @transform_1(%arg0: i32) -> (i32, i32) {
    %c0_i32 = arith.constant 0 : i32
    %c0_i32_0 = arith.constant 0 : i32
    %c0_i32_1 = arith.constant 0 : i32
    return %c0_i32, %c0_i32_0 : i32, i32
  }
  func.func @transform_2(%arg0: i32) -> (i32, i32) {
    %c0_i32 = arith.constant 0 : i32
    %c0_i32_0 = arith.constant 0 : i32
    %c0_i32_1 = arith.constant 0 : i32
    return %c0_i32, %c0_i32_0 : i32, i32
  }
  func.func @transform_3(%arg0: i32) -> (i32, i32) {
    %c0_i32 = arith.constant 0 : i32
    %c0_i32_0 = arith.constant 0 : i32
    return %arg0, %c0_i32 : i32, i32
  }
  func.func @transform_4(%arg0: i32) -> (i32, i32) {
    %c0_i32 = arith.constant 0 : i32
    %c0_i32_0 = arith.constant 0 : i32
    return %arg0, %c0_i32 : i32, i32
  }
}

</mosaic_0001>

<llo_original>
// kernel: lblpred_apply.1
$region0: #{lblpred_apply.1}
  #allocation0 [shape = 'u32[]', space=smem, size = 0x4, offset = 0x4, fixed_abs, tag = 'smem constant byte address 0x4 - core index']
  #allocation1 [shape = 'u32[72,128]{1,0:T(1,128)}', space=vmem, size = 0x9000, scoped, tag = 'internal scratch']
  %s0 = inlined_call_operand.vmem [shape: bf16[16,32], index: 0, kind: input, shape index: {}]
  %s1 = inlined_call_operand.hbm [shape: bf16[32,256], index: 1, kind: input, shape index: {}]
  %s2 = inlined_call_operand.vmem [shape: f32[1,256], index: 2, kind: input, shape index: {}]
  %s3 = inlined_call_operand.vmem [shape: f32[16,128], index: 3, kind: output, shape index: {0}]
  %s4 = inlined_call_operand.vmem [shape: f32[16,128], index: 4, kind: output, shape index: {1}]
  %5 = xla_tuple %s3, %s4
  %s6 = sld [smem:[#allocation0]]
  $region34: #{lblpred_apply.1} parent=0
    _
  %s8 = ssub.s32 1, %s6
  %s9 = scalar_select 0, %s8, %s6
  $region1: #{lblpred_apply.1} parent=0
    #allocation2 [shape = 'u8[16384]{0}', space=vmem, size = 0x4000, scoped, tag = 'input window, operand 1, single buffered']
    #allocation3 [shape = 's32[1]{0}', space=sflag, size = 0x4, scoped, tag = 'scoped memory for lblpred_apply.1']
    %10 = vsyncpa [#allocation3], 0
    // Predicated region
    $region2: #{lblpred_apply.1} parent=1 // pred_check
      _
    $region3: #{lblpred_apply.1} parent=1 // pred_check_branch
      %12 = sbr.rel (0) target = $region5
    $region4: #{lblpred_apply.1} parent=1 // pred_region
      _
    $region5: #{lblpred_apply.1} parent=1 // pred_fallthru
      _
    // Predicated region
    $region6: #{lblpred_apply.1} parent=1 // pred_check
      _
    $region7: #{lblpred_apply.1} parent=1 // pred_check_branch
      %14 = sbr.rel (0) target = $region9
    $region8: #{lblpred_apply.1} parent=1 // pred_region
      %16 = vsyncadd [#allocation3], 0
      %s17 = sshll.u32 %s1, 4
      %s18 = int_to_ptr.hbm [resolvable:$true] %s17
      %s19 = sshll.u32 [#allocation2], 4
      %s20 = int_to_ptr.vmem [resolvable:$true] %s19
      %25 = dma.hbm_to_vmem [thread:$0]  %s18, 512, %s20, [#allocation3], 128, 128, 8
    $region9: #{lblpred_apply.1} parent=1 // pred_fallthru
      _
    // Predicated region
    $region10: #{lblpred_apply.1} parent=1 // pred_check
      _
    $region11: #{lblpred_apply.1} parent=1 // pred_check_branch
      %27 = sbr.rel (0) target = $region13
    $region12: #{lblpred_apply.1} parent=1 // pred_region
      _
    $region13: #{lblpred_apply.1} parent=1 // pred_fallthru
      _
    // Predicated region
    $region14: #{lblpred_apply.1} parent=1 // pred_check
      _
    $region15: #{lblpred_apply.1} parent=1 // pred_check_branch
      %29 = sbr.rel (0) target = $region17
    $region16: #{lblpred_apply.1} parent=1 // pred_region
      %31 = dma.done [#allocation3], 512
    $region17: #{lblpred_apply.1} parent=1 // pred_fallthru
      _
    %v33 = vld [vmem:[%s0] sm:$0xf]
    %v34 = vld [vmem:[%s0 + $0x4] sm:$0xf]
    %v35 = vunpack.c.l.bf16 %v33
    %v36 = vunpack.c.l.bf16 %v34
    %v37 = vmul.f32 %v35, 0.010009766
    %v38 = vmul.f32 %v36, 0.010009766
    %v39 = vpack.c.bf16 %v37, %v37
    %v40 = vpack.c.bf16 %v38, %v38
    %v41 = vunpack.c.l.bf16 %v39
    %v42 = vunpack.c.l.bf16 %v40
    %v43 = vmax.f32 %v35, %v41
    %v44 = vmax.f32 %v36, %v42
    %v45 = vpack.c.bf16 %v44, %v43
    %v46 = vld [vmem:[#allocation2] sm:$0xf]
    %v47 = vld [vmem:[#allocation2 + $0x8] sm:$0xf]
    %v48 = vld [vmem:[#allocation2 + $0x10] sm:$0xf]
    %v49 = vld [vmem:[#allocation2 + $0x18] sm:$0xf]
    %v50 = vld [vmem:[%s2] sm:$0x1]
    %v52 = vperm.slane %v50, 0
    %v58 = vunpack.c.l.b16 %v46
    %v59 = vunpack.c.l.b16 %v47
    %v60 = vunpack.c.l.b16 %v48
    %v61 = vunpack.c.l.b16 %v49
    %v62 = vpack.c.b16 %v59, %v58
    %v63 = vpack.c.b16 %v61, %v60
    %vm66 = vcmask 261120
    %v68 = vsel %vm66, %v45, 0
    %70 = vmatpush.bf16.msra.mxu0 0
    %71 = vmatpush.bf16.msra.mxu0 0
    %72 = vmatpush.bf16.msra.mxu0 0
    %73 = vmatpush.bf16.msra.mxu0 0
    %74 = vmatpush.bf16.msra.mxu0 0
    %75 = vmatpush.bf16.msra.mxu0 0
    %76 = vmatpush.bf16.msra.mxu0 %v63
    %77 = vmatpush.bf16.msra.mxu0 %v62
    %78 = vmatmul.bf16.gmra.mxu0 %v68
    %v79 = vpop.f32.mrf.mxu0
    %v80 = vadd.f32 %v52, %v79
    %v81 = vpop.f32.mrf.mxu0
    %v82 = vadd.f32 %v52, %v81
    %83 = vdwg.mxu0
    %84 = vmax.xlane.f32.xlu0 %v80
    %v85 = vpop.xlane.xlu0 %84
    %86 = vmax.xlane.f32.xlu0 %v82
    %v87 = vpop.xlane.xlu0 %86
    %v88 = vsub.f32 %v80, %v85
    %v89 = vsub.f32 %v82, %v87
    %v90 = vmul.f32 %v88, 1.442695
    %v91 = vpow.pop %v90
    %v92 = vmul.f32 %v89, 1.442695
    %v93 = vpow.pop %v92
    %94 = vadd.xlane.f32.xlu0 %v91
    %v95 = vpop.xlane.xlu0 %94
    %96 = vadd.xlane.f32.xlu0 %v93
    %v97 = vpop.xlane.xlu0 %96
    %v98 = vrcp.pop %v95
    %v99 = vrcp.pop %v97
    %v100 = vmul.f32 %v95, %v98
    %v101 = vmul.f32 %v97, %v99
    %v102 = vsub.f32 2.0, %v100
    %v103 = vsub.f32 2.0, %v101
    %v104 = vmul.f32 %v98, %v102
    %v105 = vmul.f32 %v99, %v103
    %v106 = vmul.f32 %v91, %v104
    %v107 = vmul.f32 %v93, %v105
    %108 = vst [vmem:[%s3] sm:$0xff] %v106
    %109 = vst [vmem:[%s3 + $0x8] sm:$0xff] %v107
    %v110 = vld [vmem:[#allocation2 + $0x4] sm:$0xf]
    %v111 = vld [vmem:[#allocation2 + $0xc] sm:$0xf]
    %v112 = vld [vmem:[#allocation2 + $0x14] sm:$0xf]
    %v113 = vld [vmem:[#allocation2 + $0x1c] sm:$0xf]
    %v114 = vld [vmem:[%s2 + $0x1] sm:$0x1]
    %v116 = vperm.slane %v114, 0
    %v122 = vunpack.c.l.b16 %v110
    %v123 = vunpack.c.l.b16 %v111
    %v124 = vunpack.c.l.b16 %v112
    %v125 = vunpack.c.l.b16 %v113
    %v126 = vpack.c.b16 %v123, %v122
    %v127 = vpack.c.b16 %v125, %v124
    %130 = vmatpush.bf16.msra.mxu0 0
    %131 = vmatpush.bf16.msra.mxu0 0
    %132 = vmatpush.bf16.msra.mxu0 0
    %133 = vmatpush.bf16.msra.mxu0 0
    %134 = vmatpush.bf16.msra.mxu0 0
    %135 = vmatpush.bf16.msra.mxu0 0
    %136 = vmatpush.bf16.msra.mxu0 %v127
    %137 = vmatpush.bf16.msra.mxu0 %v126
    %138 = vmatmul.bf16.gmra.mxu0 %v68
    %v139 = vpop.f32.mrf.mxu0
    %v140 = vadd.f32 %v116, %v139
    %v141 = vpop.f32.mrf.mxu0
    %v142 = vadd.f32 %v116, %v141
    %143 = vdwg.mxu0
    %144 = vmax.xlane.f32.xlu0 %v140
    %v145 = vpop.xlane.xlu0 %144
    %146 = vmax.xlane.f32.xlu0 %v142
    %v147 = vpop.xlane.xlu0 %146
    %v148 = vsub.f32 %v140, %v145
    %v149 = vsub.f32 %v142, %v147
    %v150 = vmul.f32 %v148, 1.442695
    %v151 = vpow.pop %v150
    %v152 = vmul.f32 %v149, 1.442695
    %v153 = vpow.pop %v152
    %154 = vadd.xlane.f32.xlu0 %v151
    %v155 = vpop.xlane.xlu0 %154
    %156 = vadd.xlane.f32.xlu0 %v153
    %v157 = vpop.xlane.xlu0 %156
    %v158 = vrcp.pop %v155
    %v159 = vrcp.pop %v157
    %v160 = vmul.f32 %v155, %v158
    %v161 = vmul.f32 %v157, %v159
    %v162 = vsub.f32 2.0, %v160
    %v163 = vsub.f32 2.0, %v161
    %v164 = vmul.f32 %v158, %v162
    %v165 = vmul.f32 %v159, %v163
    %v166 = vmul.f32 %v151, %v164
    %v167 = vmul.f32 %v153, %v165
    %168 = vst [vmem:[%s4] sm:$0xff] %v166
    %169 = vst [vmem:[%s4 + $0x8] sm:$0xff] %v167
    // Predicated region
    $region18: #{lblpred_apply.1} parent=1 // pred_check
      _
    $region19: #{lblpred_apply.1} parent=1 // pred_check_branch
      %171 = sbr.rel (0) target = $region21
    $region20: #{lblpred_apply.1} parent=1 // pred_region
      _
    $region21: #{lblpred_apply.1} parent=1 // pred_fallthru
      _
    // Predicated region
    $region22: #{lblpred_apply.1} parent=1 // pred_check
      _
    $region23: #{lblpred_apply.1} parent=1 // pred_check_branch
      %173 = sbr.rel (0) target = $region25
    $region24: #{lblpred_apply.1} parent=1 // pred_region
      _
    $region25: #{lblpred_apply.1} parent=1 // pred_fallthru
      _
    // Predicated region
    $region26: #{lblpred_apply.1} parent=1 // pred_check
      _
    $region27: #{lblpred_apply.1} parent=1 // pred_check_branch
      %175 = sbr.rel (0) target = $region29
    $region28: #{lblpred_apply.1} parent=1 // pred_region
      _
    $region29: #{lblpred_apply.1} parent=1 // pred_fallthru
      _
    // Predicated region
    $region30: #{lblpred_apply.1} parent=1 // pred_check
      _
    $region31: #{lblpred_apply.1} parent=1 // pred_check_branch
      %177 = sbr.rel (0) target = $region33
    $region32: #{lblpred_apply.1} parent=1 // pred_region
      _
    $region33: #{lblpred_apply.1} parent=1 // pred_fallthru
      _
    %178 = vsyncpa [#allocation3], 1

</llo_original>
